<compile_context>
chip_gen: v7x
topology: tpu7x:2x2x1
jax: 0.10.0
libtpu: 0.0.40
codegen_flags: <defaults>
</compile_context>

<pallas_src>
import math
import functools

import jax
import jax.numpy as jnp
from jax.experimental import pallas as pl
from jax.experimental.pallas import tpu as pltpu


def _make_pe(max_len: int, d_model: int) -> jnp.ndarray:
    """Deterministic sinusoidal positional-encoding table (same as __init__)."""
    pos = jnp.arange(max_len, dtype=jnp.float32)[:, None]                 # (L, 1)
    div = jnp.exp(jnp.arange(0, d_model, 2, dtype=jnp.float32)
                  * (-math.log(10000.0) / d_model))                       # (D/2,)
    pe = jnp.zeros((max_len, d_model), dtype=jnp.float32)
    pe = pe.at[:, 0::2].set(jnp.sin(pos * div))
    pe = pe.at[:, 1::2].set(jnp.cos(pos * div))
    return pe


# ----------------------------------------------------------------------------
# Kernels (operate on lane-dense 2-D views: x (tb, L), pe (1, L))
# ----------------------------------------------------------------------------
def _pe_add_kernel(x_ref, pe_ref, o_ref):
    # Straight VPU add; pe row broadcasts over the sublane (row) axis.
    o_ref[...] = (x_ref[...] + pe_ref[...]).astype(o_ref.dtype)


def _pe_add_dropout_kernel(x_ref, pe_ref, bits_ref, o_ref, *, p: float):
    y = x_ref[...] + pe_ref[...]
    # Integer-threshold dropout: P(bits < thresh) == p  (bits uniform in [0, 2^32)).
    thresh = jnp.uint32(min(int(round(p * (2.0 ** 32))), 2 ** 32 - 1))
    keep = bits_ref[...] >= thresh
    scale = jnp.float32(1.0 / (1.0 - p))
    o_ref[...] = jnp.where(keep, y * scale, jnp.zeros_like(y)).astype(o_ref.dtype)


# ----------------------------------------------------------------------------
# Wrapper
# ----------------------------------------------------------------------------
def _pick_row_block(n_rows: int, row_elems: int, itemsize: int,
                    target_bytes: int = 2 << 20) -> int:
    """Largest legal row-block (divides n_rows; multiple of 8 or == n_rows)
    whose footprint stays under ~target_bytes.  Falls back to the smallest
    legal block if even that exceeds the target."""
    cands = [tb for tb in range(1, n_rows + 1)
             if n_rows % tb == 0 and (tb % 8 == 0 or tb == n_rows)]
    fitting = [tb for tb in cands if tb * row_elems * itemsize <= target_bytes]
    return max(fitting) if fitting else min(cands)


def positional_encoding(x, pe, *, dropout_p: float = 0.1,
                        train: bool = False, rng_key=None):
    """x: (B, S, D); pe: (max_len, D) float32.  Returns (B, S, D) of x.dtype."""
    B, S, D = x.shape
    assert pe.shape[1] == D and pe.shape[0] >= S
    assert 0.0 <= dropout_p < 1.0

    L = S * D
    x2 = x.reshape(B, L)                                   # lane-dense rows
    pe_row = pe[:S, :].reshape(1, L).astype(jnp.float32)   # broadcast row

    tb = _pick_row_block(B, L, jnp.dtype(x.dtype).itemsize)
    grid = (B // tb,)

    row_spec = pl.BlockSpec((tb, L), lambda i: (i, 0))
    pe_spec = pl.BlockSpec((1, L), lambda i: (0, 0))       # constant -> reused, no re-fetch

    compiler_params = pltpu.CompilerParams(
        dimension_semantics=("parallel",),                 # independent steps (v7x: 2 TCs)
        vmem_limit_bytes=32 * 1024 * 1024,                 # blocks bounded to ~2 MiB each
    )
    out_shape = jax.ShapeDtypeStruct((B, L), x.dtype)

    if train and dropout_p > 0.0:
        if rng_key is None:
            rng_key = jax.random.PRNGKey(0)
        # Random bits generated outside the kernel (portable across backends);
        # the kernel fuses the mask+scale with the add.
        bits = jax.random.bits(rng_key, (B, L), dtype=jnp.uint32)
        kernel = functools.partial(_pe_add_dropout_kernel, p=float(dropout_p))
        out2 = pl.pallas_call(
            kernel,
            out_shape=out_shape,
            grid=grid,
            in_specs=[row_spec, pe_spec, pl.BlockSpec((tb, L), lambda i: (i, 0))],
            out_specs=row_spec,
            compiler_params=compiler_params,
        )(x2, pe_row, bits)
    else:
        out2 = pl.pallas_call(
            _pe_add_kernel,
            out_shape=out_shape,
            grid=grid,
            in_specs=[row_spec, pe_spec],
            out_specs=row_spec,
            compiler_params=compiler_params,
        )(x2, pe_row)

    return out2.reshape(B, S, D)


if __name__ == "__main__":
    d_model = 32
    max_len = 2000
    B, S = 2, 8
    p = 0.1

    key = jax.random.PRNGKey(0)
    x = jax.random.normal(key, (B, S, d_model), dtype=jnp.float32)
    pe = _make_pe(max_len, d_model)
    ref = x + pe[:S, :][None, :, :]

    # Eval mode (dropout == identity): must match x + pe[:S] exactly.
    out_eval = positional_encoding(x, pe, dropout_p=p, train=False)
    out_eval = jax.block_until_ready(out_eval)
    assert out_eval.shape == (B, S, d_model)
    assert jnp.allclose(out_eval, ref, atol=1e-6, rtol=1e-6), "eval mismatch"

    # Training mode: exercises the fused dropout path (deterministic per key).
    out_train = positional_encoding(x, pe, dropout_p=p, train=True,
                                    rng_key=jax.random.PRNGKey(123))
    out_train = jax.block_until_ready(out_train)
    assert out_train.shape == (B, S, d_model)
    assert bool(jnp.all(jnp.isfinite(out_train)))
    # Surviving (non-dropped) elements are exact scaled copies of the eval output.
    mask = out_train != 0
    assert jnp.allclose(jnp.where(mask, out_train * (1.0 - p), 0.0),
                        jnp.where(mask, ref, 0.0), atol=1e-5)

    print("KERNEL_OK")
</pallas_src>

<mosaic_0001>
module attributes {stable_mosaic.version = 11 : i64} {
  func.func @_pe_add_kernel(%arg0: i32, %arg1: memref<2x256xf32, #tpu.memory_space<vmem>>, %arg2: memref<1x256xf32, #tpu.memory_space<vmem>>, %arg3: memref<2x256xf32, #tpu.memory_space<vmem>>) attributes {dimension_semantics = [#tpu.dimension_semantics<parallel>], iteration_bounds = array<i64: 1>, scalar_prefetch = 0 : i64, scratch_operands = 0 : i64, tpu.core_type = #tpu.core_type<tc>, window_params = [{transform_indices = @transform_0, window_bounds = array<i64: 2, 256>}, {pipeline_mode = #tpu.pipeline_mode<synchronous>, transform_indices = @transform_1, window_bounds = array<i64: 1, 256>}, {transform_indices = @transform_2, window_bounds = array<i64: 2, 256>}]} {
    %c0 = arith.constant 0 : index
    %c0_0 = arith.constant 0 : index
    %0 = vector.load %arg1[%c0, %c0_0] : memref<2x256xf32, #tpu.memory_space<vmem>>, vector<2x256xf32>
    %c0_1 = arith.constant 0 : index
    %c0_2 = arith.constant 0 : index
    %1 = vector.load %arg2[%c0_1, %c0_2] : memref<1x256xf32, #tpu.memory_space<vmem>>, vector<1x256xf32>
    %2 = vector.broadcast %1 : vector<1x256xf32> to vector<2x256xf32>
    %3 = arith.addf %0, %2 : vector<2x256xf32>
    %c0_3 = arith.constant 0 : index
    %c0_4 = arith.constant 0 : index
    %4 = vector.load %arg3[%c0_3, %c0_4] : memref<2x256xf32, #tpu.memory_space<vmem>>, vector<2x256xf32>
    tpu.vector_store %arg3[%c0_3, %c0_4], %3 {strides = array<i32>} : memref<2x256xf32, #tpu.memory_space<vmem>>, vector<2x256xf32>,
    return
  }
  func.func @transform_0(%arg0: i32) -> (i32, i32) {
    %c0_i32 = arith.constant 0 : i32
    %c0_i32_0 = arith.constant 0 : i32
    return %arg0, %c0_i32 : i32, i32
  }
  func.func @transform_1(%arg0: i32) -> (i32, i32) {
    %c0_i32 = arith.constant 0 : i32
    %c0_i32_0 = arith.constant 0 : i32
    %c0_i32_1 = arith.constant 0 : i32
    return %c0_i32, %c0_i32_0 : i32, i32
  }
  func.func @transform_2(%arg0: i32) -> (i32, i32) {
    %c0_i32 = arith.constant 0 : i32
    %c0_i32_0 = arith.constant 0 : i32
    return %arg0, %c0_i32 : i32, i32
  }
}

</mosaic_0001>

<llo_original>
// kernel: tpu_custom_call.1
$region0: #{tpu_custom_call.1}
  #allocation0 [shape = 'u32[]', space=smem, size = 0x4, offset = 0x4, fixed_abs, tag = 'smem constant byte address 0x4 - core index']
  #allocation1 [shape = 'u32[144,128]{1,0:T(1,128)}', space=vmem, size = 0x12000, scoped, tag = 'internal scratch']
  %s0 = inlined_call_operand.hbm [shape: f32[2,256], index: 0, kind: input, shape index: {}]
  %s1 = inlined_call_operand.vmem [shape: f32[1,256], index: 1, kind: input, shape index: {}]
  %s2 = inlined_call_operand.hbm [shape: f32[2,256], index: 2, kind: output, shape index: {}]
  %s3 = sld [smem:[#allocation0]]
  $region22: #{tpu_custom_call.1} parent=0
    _
  %s5 = ssub.s32 1, %s3
  %s6 = scalar_select 0, %s5, %s3
  $region1: #{tpu_custom_call.1} parent=0
    #allocation2 [shape = 'u8[2048]{0}', space=vmem, size = 0x800, scoped, tag = 'input window, operand 0, single buffered']
    #allocation3 [shape = 's32[1]{0}', space=sflag, size = 0x4, scoped, tag = 'scoped memory for tpu_custom_call.1']
    #allocation4 [shape = 's32[1]{0}', space=sflag, size = 0x4, scoped, tag = 'scoped memory for tpu_custom_call.1']
    #allocation5 [shape = 'u8[2048]{0}', space=vmem, size = 0x800, scoped, tag = 'output window, operand 0, single buffered']
    %7 = vsyncpa [#allocation3], 0
    %8 = vsyncpa [#allocation4], 0
    // Predicated region
    $region2: #{tpu_custom_call.1} parent=1 // pred_check
      _
    $region3: #{tpu_custom_call.1} parent=1 // pred_check_branch
      %10 = sbr.rel (0) target = $region5
    $region4: #{tpu_custom_call.1} parent=1 // pred_region
      %s12 = ssub.s32 64, 64
      %13 = vsyncadd [#allocation3], %s12
      %s15 = sshll.u32 [#allocation2], 4
      %s16 = int_to_ptr.vmem [resolvable:$true] %s15
      %18 = dma.hbm_to_vmem [thread:$0]  %s0, 64, %s16, [#allocation3]
    $region5: #{tpu_custom_call.1} parent=1 // pred_fallthru
      _
    // Predicated region
    $region6: #{tpu_custom_call.1} parent=1 // pred_check
      _
    $region7: #{tpu_custom_call.1} parent=1 // pred_check_branch
      %20 = sbr.rel (0) target = $region9
    $region8: #{tpu_custom_call.1} parent=1 // pred_region
      _
    $region9: #{tpu_custom_call.1} parent=1 // pred_fallthru
      _
    // Predicated region
    $region10: #{tpu_custom_call.1} parent=1 // pred_check
      _
    $region11: #{tpu_custom_call.1} parent=1 // pred_check_branch
      %22 = sbr.rel (0) target = $region13
    $region12: #{tpu_custom_call.1} parent=1 // pred_region
      %23 = dma.done [#allocation3], 64
    $region13: #{tpu_custom_call.1} parent=1 // pred_fallthru
      _
    %v24 = vld [vmem:[#allocation2] sm:$0xf]
    %v25 = vld [vmem:[%s1] sm:$0x3]
    %v27 = vlaneseq
    %v28 = vshrl.u32 %v27, 7
    %v29 = vsub.s32 0, %v28
    %v30 = vrot.slane %v25, %v29
    %v31 = vlaneseq
    %v32 = vshrl.u32 %v31, 7
    %v33 = vsub.s32 1, %v32
    %v34 = vrot.slane %v25, %v33
    %v35 = vcombine.low %v30, %v34
    %v37 = vunpack.c.l.s4 1983009808
    %v38 = vunpack.c.0.s8 %v37
    %v39 = vlaneseq
    %v40 = vshrl.u32 %v39, 7
    %v41 = vsub.s32 %v38, %v40
    %v42 = vrot.slane %v35, %v41
    %v44 = vadd.f32 %v24, %v42
    %45 = vst [vmem:[#allocation5] sm:$0xf] %v44
    // Predicated region
    $region14: #{tpu_custom_call.1} parent=1 // pred_check
      _
    $region15: #{tpu_custom_call.1} parent=1 // pred_check_branch
      %47 = sbr.rel (0) target = $region17
    $region16: #{tpu_custom_call.1} parent=1 // pred_region
      %s49 = ssub.s32 64, 64
      %50 = vsyncadd [#allocation4], %s49
      %s52 = sshll.u32 [#allocation5], 4
      %s53 = int_to_ptr.vmem [resolvable:$true] %s52
      %55 = dma.vmem_to_hbm [thread:$0]  %s53, 64, %s2, [#allocation4]
    $region17: #{tpu_custom_call.1} parent=1 // pred_fallthru
      _
    // Predicated region
    $region18: #{tpu_custom_call.1} parent=1 // pred_check
      _
    $region19: #{tpu_custom_call.1} parent=1 // pred_check_branch
      %57 = sbr.rel (0) target = $region21
    $region20: #{tpu_custom_call.1} parent=1 // pred_region
      %58 = dma.done [#allocation4], 64
    $region21: #{tpu_custom_call.1} parent=1 // pred_fallthru
      _
    %59 = vsyncpa [#allocation3], 1
    %60 = vsyncpa [#allocation4], 1

</llo_original>
